<compile_context>
chip_gen: v7x
topology: tpu7x:2x2x1
jax: 0.10.0
libtpu: 0.0.40
codegen_flags: <defaults>
</compile_context>

<pallas_src>
import functools

import jax
import jax.numpy as jnp
from jax.experimental import pallas as pl
from jax.experimental.pallas import tpu as pltpu

EPS = 1e-12          # matches torch.nn.functional.normalize eps
EPS2 = EPS * EPS     # clamp on the squared norm before rsqrt (== clamp on norm)
NEG = -1e30          # effective -inf for masked entries (finite: no inf math)


def _round_up(x, m):
    return ((x + m - 1) // m) * m


def _triplet_loss_kernel(a_ref, t_ref, ttn_ref, labc_ref, labr_ref,
                         rowcost_ref, diag_ref, cmax_ref,
                         anbf_ref, d1_ref, rowmax_ref,
                         *, margin):
    j = pl.program_id(1)

    # ---- once per row tile (first column tile) ------------------------------
    @pl.when(j == 0)
    def _init_row_tile():
        a32 = a_ref[...].astype(jnp.float32)                         # (TM, Dp)
        t32 = t_ref[...].astype(jnp.float32)                         # (TM, Dp)
        a_n = a32 * jax.lax.rsqrt(
            jnp.maximum(jnp.sum(a32 * a32, axis=-1, keepdims=True), EPS2))
        t_n = t32 * jax.lax.rsqrt(
            jnp.maximum(jnp.sum(t32 * t32, axis=-1, keepdims=True), EPS2))
        d1 = jnp.sum(a_n * t_n, axis=-1, keepdims=True)              # (TM, 1) f32
        anbf_ref[...] = a_n.astype(jnp.bfloat16)   # bf16 MXU LHS, reused over j
        d1_ref[...] = d1
        diag_ref[...] = d1            # sim_ap in sublane layout; wrapper reuses as d2
        rowmax_ref[...] = jnp.full_like(rowmax_ref, NEG)

    # ---- per (row tile, column tile) -----------------------------------------
    # cosine-sim block on the MXU: bf16 operands, f32 accumulation, (M,K)x(K,N)
    sim = jnp.dot(anbf_ref[...], ttn_ref[...],
                  preferred_element_type=jnp.float32)                # (TM, TN) f32
    # only the label-equality mask is needed: padded rows/cols are replicas of
    # the last real row/col and can never change a max
    msim = jnp.where(labc_ref[...] == labr_ref[...], NEG, sim)
    cmax_ref[0] = jnp.max(msim, axis=0, keepdims=True)               # (1, TN) partial
    rowmax_ref[...] = jnp.maximum(rowmax_ref[...],
                                  jnp.max(msim, axis=1, keepdims=True))

    # ---- once per row tile (last column tile) --------------------------------
    @pl.when(j == pl.num_programs(1) - 1)
    def _finish_row_tile():
        rowcost_ref[...] = jnp.maximum(margin - d1_ref[...] + rowmax_ref[...], 0.0)


def triplet_loss(audio_embeds, text_embeds, labels, margin=0.2,
                 block_rows=256, block_cols=512):
    n, d = audio_embeds.shape
    assert block_rows % 8 == 0 and block_cols % 128 == 0

    tm = min(int(block_rows), _round_up(n, 8))       # row tile (sublane-aligned)
    n_rows = _round_up(n, tm)
    cols128 = _round_up(n, 128)                      # lane-dense column padding
    if cols128 <= block_cols:
        tn, n_cols = cols128, cols128                # single column tile
    else:
        tn, n_cols = int(block_cols), _round_up(n, int(block_cols))
    d_pad = _round_up(d, 128)                        # aligned contraction dim
    grid_rows, grid_cols = n_rows // tm, n_cols // tn

    # ---- wrapper = layout plumbing + one O(n*D) normalization of the RHS -----
    def pad_rows_edge(x, rows):
        return jnp.pad(x, ((0, rows - x.shape[0]),) + ((0, 0),) * (x.ndim - 1),
                       mode="edge")

    # caller dtype preserved (no f32 upcast); zero-pad features, replicate rows
    a_p = pad_rows_edge(jnp.pad(audio_embeds, ((0, 0), (0, d_pad - d))), n_rows)
    t_p = pad_rows_edge(jnp.pad(text_embeds, ((0, 0), (0, d_pad - d))), n_rows)

    # normalized text^T in bf16 = streamed MXU RHS (f32 math, then cast)
    t32 = text_embeds.astype(jnp.float32)
    t_nrm = t32 * jax.lax.rsqrt(
        jnp.maximum(jnp.sum(t32 * t32, axis=-1, keepdims=True), EPS2))
    ttn = pad_rows_edge(jnp.pad(t_nrm, ((0, 0), (0, d_pad - d))), n_cols)
    ttn = ttn.T.astype(jnp.bfloat16)                          # (Dp, n_cols)

    lab = labels.astype(jnp.int32)
    lab_col = pad_rows_edge(lab.reshape(n, 1), n_rows)                # (n_rows, 1)
    lab_row = pad_rows_edge(lab.reshape(n, 1), n_cols).reshape(1, n_cols)

    # generation-aware VMEM cap (~75% of physical: 48 MiB on v7x, 96 MiB v5e/v6e)
    try:
        vmem_cap = pltpu.get_tpu_info().vmem_capacity_bytes
    except Exception:
        vmem_cap = 64 * 1024 * 1024
    vmem_limit = int(min(vmem_cap * 3 // 4, 100 * 1024 * 1024))

    kernel = functools.partial(_triplet_loss_kernel, margin=float(margin))
    rowcost, diag, cmax_parts = pl.pallas_call(
        kernel,
        out_shape=(
            jax.ShapeDtypeStruct((n_rows, 1), jnp.float32),          # per-row cost_s
            jax.ShapeDtypeStruct((n_rows, 1), jnp.float32),          # diag sim_ap
            jax.ShapeDtypeStruct((grid_rows, 1, n_cols), jnp.float32),  # colmax partials
        ),
        grid=(grid_rows, grid_cols),
        in_specs=[
            pl.BlockSpec((tm, d_pad), lambda i, j: (i, 0)),   # audio row tile
            pl.BlockSpec((tm, d_pad), lambda i, j: (i, 0)),   # text row tile (f32 diag)
            pl.BlockSpec((d_pad, tn), lambda i, j: (0, j)),   # normalized text^T (bf16 RHS)
            pl.BlockSpec((tm, 1), lambda i, j: (i, 0)),       # labels as column
            pl.BlockSpec((1, tn), lambda i, j: (0, j)),       # labels as row
        ],
        out_specs=(
            pl.BlockSpec((tm, 1), lambda i, j: (i, 0)),
            pl.BlockSpec((tm, 1), lambda i, j: (i, 0)),
            pl.BlockSpec((1, 1, tn), lambda i, j: (i, 0, j)),
        ),
        scratch_shapes=[
            pltpu.VMEM((tm, d_pad), jnp.bfloat16),   # normalized bf16 LHS (per row tile)
            pltpu.VMEM((tm, 1), jnp.float32),        # d1 (diag of this row tile)
            pltpu.VMEM((tm, 1), jnp.float32),        # running row-wise max over col tiles
        ],
        compiler_params=pltpu.CompilerParams(
            dimension_semantics=("parallel", "arbitrary"),   # rows megacore-splittable
            vmem_limit_bytes=vmem_limit,
        ),
    )(a_p, t_p, ttn, lab_col, lab_row)

    # tiny O(grid_rows * n) combine: drop replicated padding, reduce partials
    row_part = jnp.sum(rowcost[:n, 0])
    cmax = jnp.max(cmax_parts[:, 0, :n], axis=0)                      # (n,)
    col_part = jnp.sum(jnp.maximum(margin - diag[:n, 0] + cmax, 0.0))
    return (row_part + col_part) / n


def _reference_loss(audio_embeds, text_embeds, labels, margin=0.2):
    # plain-JAX reference, mirrors the PyTorch forward exactly
    a = audio_embeds.astype(jnp.float32)
    t = text_embeds.astype(jnp.float32)
    a_n = a / jnp.maximum(jnp.linalg.norm(a, axis=1, keepdims=True), EPS)
    t_n = t / jnp.maximum(jnp.linalg.norm(t, axis=1, keepdims=True), EPS)
    sim = a_n @ t_n.T
    n = sim.shape[0]
    sim_ap = jnp.diag(sim).reshape(n, 1)
    cost_s = jnp.maximum(margin + sim - sim_ap, 0.0)
    cost_a = jnp.maximum(margin + sim - sim_ap.T, 0.0)
    mask = labels.reshape(n, 1) == labels.reshape(1, n)
    cost_s = jnp.where(mask, 0.0, cost_s)
    cost_a = jnp.where(mask, 0.0, cost_a)
    return (jnp.sum(jnp.max(cost_s, axis=1))
            + jnp.sum(jnp.max(cost_a, axis=0))) / n


if __name__ == "__main__":
    key = jax.random.PRNGKey(0)
    keys = jax.random.split(key, 8)

    # case 1: small shapes matching the module (n=8, D=32), single-tile grid
    n1, dim1 = 8, 32
    audio1 = jax.random.normal(keys[0], (n1, dim1), dtype=jnp.float32)
    text1 = jax.random.normal(keys[1], (n1, dim1), dtype=jnp.float32)
    labels1 = jax.random.randint(keys[2], (n1,), 0, 4, dtype=jnp.int32)
    loss1 = triplet_loss(audio1, text1, labels1)
    jax.block_until_ready(loss1)
    ref1 = _reference_loss(audio1, text1, labels1)
    assert jnp.allclose(loss1, ref1, atol=2e-2, rtol=2e-2), (loss1, ref1)

    # case 2: multi-tile grid on BOTH axes (small tiles force a 4x2 grid)
    n2, dim2 = 200, 48
    audio2 = jax.random.normal(keys[3], (n2, dim2), dtype=jnp.float32)
    text2 = jax.random.normal(keys[4], (n2, dim2), dtype=jnp.float32)
    labels2 = jax.random.randint(keys[5], (n2,), 0, 13, dtype=jnp.int32)
    loss2 = triplet_loss(audio2, text2, labels2, block_rows=64, block_cols=128)
    jax.block_until_ready(loss2)
    ref2 = _reference_loss(audio2, text2, labels2)
    assert jnp.allclose(loss2, ref2, atol=2e-2, rtol=2e-2), (loss2, ref2)

    # case 2b: same data through the default (single-tile) tiling path
    loss2b = triplet_loss(audio2, text2, labels2)
    jax.block_until_ready(loss2b)
    assert jnp.allclose(loss2b, ref2, atol=2e-2, rtol=2e-2), (loss2b, ref2)

    # case 3: degenerate all-same-label batch -> everything masked -> loss 0
    audio3 = jax.random.normal(keys[6], (16, 32), dtype=jnp.float32)
    text3 = jax.random.normal(keys[7], (16, 32), dtype=jnp.float32)
    labels3 = jnp.zeros((16,), dtype=jnp.int32)
    loss3 = triplet_loss(audio3, text3, labels3)
    jax.block_until_ready(loss3)
    ref3 = _reference_loss(audio3, text3, labels3)
    assert jnp.allclose(loss3, ref3, atol=2e-2, rtol=2e-2), (loss3, ref3)

    print("KERNEL_OK")
</pallas_src>

<mosaic_0001>
module attributes {stable_mosaic.version = 11 : i64} {
  func.func @_triplet_loss_kernel(%arg0: i32, %arg1: i32, %arg2: memref<8x128xf32, #tpu.memory_space<vmem>>, %arg3: memref<8x128xf32, #tpu.memory_space<vmem>>, %arg4: memref<128x128xbf16, #tpu.memory_space<vmem>>, %arg5: memref<8x1xi32, #tpu.memory_space<vmem>>, %arg6: memref<1x128xi32, #tpu.memory_space<vmem>>, %arg7: memref<8x1xf32, #tpu.memory_space<vmem>>, %arg8: memref<8x1xf32, #tpu.memory_space<vmem>>, %arg9: memref<1x1x128xf32, #tpu.memory_space<vmem>>, %arg10: memref<8x128xbf16, #tpu.memory_space<vmem>>, %arg11: memref<8x1xf32, #tpu.memory_space<vmem>>, %arg12: memref<8x1xf32, #tpu.memory_space<vmem>>) attributes {dimension_semantics = [#tpu.dimension_semantics<parallel>, #tpu.dimension_semantics<arbitrary>], iteration_bounds = array<i64: 1, 1>, scalar_prefetch = 0 : i64, scratch_operands = 3 : i64, tpu.core_type = #tpu.core_type<tc>, window_params = [{transform_indices = @transform_0, window_bounds = array<i64: 8, 128>}, {transform_indices = @transform_1, window_bounds = array<i64: 8, 128>}, {transform_indices = @transform_2, window_bounds = array<i64: 128, 128>}, {transform_indices = @transform_3, window_bounds = array<i64: 8, 1>}, {transform_indices = @transform_4, window_bounds = array<i64: 1, 128>}, {transform_indices = @transform_5, window_bounds = array<i64: 8, 1>}, {transform_indices = @transform_6, window_bounds = array<i64: 8, 1>}, {transform_indices = @transform_7, window_bounds = array<i64: 1, 1, 128>}]} {
    %c0_i32 = arith.constant 0 : i32
    %0 = arith.cmpi eq, %arg1, %c0_i32 : i32
    %1 = arith.extui %0 : i1 to i32
    %c0_i32_0 = arith.constant 0 : i32
    %2 = arith.cmpi ne, %1, %c0_i32_0 : i32
    scf.if %2 {
      %c0_20 = arith.constant 0 : index
      %c0_21 = arith.constant 0 : index
      %26 = vector.load %arg2[%c0_20, %c0_21] : memref<8x128xf32, #tpu.memory_space<vmem>>, vector<8x128xf32>
      %c0_22 = arith.constant 0 : index
      %c0_23 = arith.constant 0 : index
      %27 = vector.load %arg3[%c0_22, %c0_23] : memref<8x128xf32, #tpu.memory_space<vmem>>, vector<8x128xf32>
      %28 = arith.mulf %26, %26 : vector<8x128xf32>
      %cst_24 = arith.constant dense<0.000000e+00> : vector<8xf32>
      %29 = vector.multi_reduction <add>, %28, %cst_24 [1] : vector<8x128xf32> to vector<8xf32>
      %30 = vector.shape_cast %29 : vector<8xf32> to vector<8x1xf32>
      %cst_25 = arith.constant 1.000000e-24 : f32
      %31 = vector.broadcast %cst_25 : f32 to vector<8x1xf32>
      %32 = arith.maximumf %30, %31 : vector<8x1xf32>
      %33 = math.rsqrt %32 : vector<8x1xf32>
      %34 = vector.broadcast %33 : vector<8x1xf32> to vector<8x128xf32>
      %35 = arith.mulf %26, %34 : vector<8x128xf32>
      %36 = arith.mulf %27, %27 : vector<8x128xf32>
      %cst_26 = arith.constant dense<0.000000e+00> : vector<8xf32>
      %37 = vector.multi_reduction <add>, %36, %cst_26 [1] : vector<8x128xf32> to vector<8xf32>
      %38 = vector.shape_cast %37 : vector<8xf32> to vector<8x1xf32>
      %cst_27 = arith.constant 1.000000e-24 : f32
      %39 = vector.broadcast %cst_27 : f32 to vector<8x1xf32>
      %40 = arith.maximumf %38, %39 : vector<8x1xf32>
      %41 = math.rsqrt %40 : vector<8x1xf32>
      %42 = vector.broadcast %41 : vector<8x1xf32> to vector<8x128xf32>
      %43 = arith.mulf %27, %42 : vector<8x128xf32>
      %44 = arith.mulf %35, %43 : vector<8x128xf32>
      %cst_28 = arith.constant dense<0.000000e+00> : vector<8xf32>
      %45 = vector.multi_reduction <add>, %44, %cst_28 [1] : vector<8x128xf32> to vector<8xf32>
      %46 = vector.shape_cast %45 : vector<8xf32> to vector<8x1xf32>
      %47 = arith.truncf %35 : vector<8x128xf32> to vector<8x128xbf16>
      %c0_29 = arith.constant 0 : index
      %c0_30 = arith.constant 0 : index
      %48 = vector.load %arg10[%c0_29, %c0_30] : memref<8x128xbf16, #tpu.memory_space<vmem>>, vector<8x128xbf16>
      tpu.vector_store %arg10[%c0_29, %c0_30], %47 {strides = array<i32>} : memref<8x128xbf16, #tpu.memory_space<vmem>>, vector<8x128xbf16>,
      %c0_31 = arith.constant 0 : index
      %c0_32 = arith.constant 0 : index
      %49 = vector.load %arg11[%c0_31, %c0_32] : memref<8x1xf32, #tpu.memory_space<vmem>>, vector<8x1xf32>
      tpu.vector_store %arg11[%c0_31, %c0_32], %46 {strides = array<i32>} : memref<8x1xf32, #tpu.memory_space<vmem>>, vector<8x1xf32>,
      %c0_33 = arith.constant 0 : index
      %c0_34 = arith.constant 0 : index
      %50 = vector.load %arg8[%c0_33, %c0_34] : memref<8x1xf32, #tpu.memory_space<vmem>>, vector<8x1xf32>
      tpu.vector_store %arg8[%c0_33, %c0_34], %46 {strides = array<i32>} : memref<8x1xf32, #tpu.memory_space<vmem>>, vector<8x1xf32>,
      %cst_35 = arith.constant -1.000000e+30 : f32
      %51 = vector.broadcast %cst_35 : f32 to vector<8x1xf32>
      %c0_36 = arith.constant 0 : index
      %c0_37 = arith.constant 0 : index
      %52 = vector.load %arg12[%c0_36, %c0_37] : memref<8x1xf32, #tpu.memory_space<vmem>>, vector<8x1xf32>
      tpu.vector_store %arg12[%c0_36, %c0_37], %51 {strides = array<i32>} : memref<8x1xf32, #tpu.memory_space<vmem>>, vector<8x1xf32>,
    } else {
    }
    %c0 = arith.constant 0 : index
    %c0_1 = arith.constant 0 : index
    %3 = vector.load %arg10[%c0, %c0_1] : memref<8x128xbf16, #tpu.memory_space<vmem>>, vector<8x128xbf16>
    %c0_2 = arith.constant 0 : index
    %c0_3 = arith.constant 0 : index
    %4 = vector.load %arg4[%c0_2, %c0_3] : memref<128x128xbf16, #tpu.memory_space<vmem>>, vector<128x128xbf16>
    %cst = arith.constant dense<0.000000e+00> : vector<8x128xf32>
    %5 = tpu.matmul %3, %4, %cst {dimension_numbers = #tpu.dot_dimension_numbers<[1], [0], [0], [1], [0, 0, 1, 1], [], []>} : vector<8x128xbf16>, vector<128x128xbf16>, vector<8x128xf32> -> vector<8x128xf32>
    %c0_4 = arith.constant 0 : index
    %c0_5 = arith.constant 0 : index
    %6 = vector.load %arg5[%c0_4, %c0_5] : memref<8x1xi32, #tpu.memory_space<vmem>>, vector<8x1xi32>
    %c0_6 = arith.constant 0 : index
    %c0_7 = arith.constant 0 : index
    %7 = vector.load %arg6[%c0_6, %c0_7] : memref<1x128xi32, #tpu.memory_space<vmem>>, vector<1x128xi32>
    %8 = vector.broadcast %6 : vector<8x1xi32> to vector<8x128xi32>
    %9 = vector.broadcast %7 : vector<1x128xi32> to vector<8x128xi32>
    %10 = arith.cmpi eq, %8, %9 : vector<8x128xi32>
    %cst_8 = arith.constant -1.000000e+30 : f32
    %11 = vector.broadcast %cst_8 : f32 to vector<8x128xf32>
    %12 = arith.select %10, %11, %5 : vector<8x128xi1>, vector<8x128xf32>
    %cst_9 = arith.constant dense<0xFF800000> : vector<128xf32>
    %13 = vector.multi_reduction <maximumf>, %12, %cst_9 [0] : vector<8x128xf32> to vector<128xf32>
    %14 = vector.shape_cast %13 : vector<128xf32> to vector<1x128xf32>
    %c0_10 = arith.constant 0 : index
    %c0_11 = arith.constant 0 : index
    %c0_12 = arith.constant 0 : index
    %15 = vector.load %arg9[%c0_10, %c0_11, %c0_12] : memref<1x1x128xf32, #tpu.memory_space<vmem>>, vector<1x1x128xf32>
    %16 = vector.shape_cast %15 : vector<1x1x128xf32> to vector<1x128xf32>
    %17 = vector.shape_cast %14 : vector<1x128xf32> to vector<1x1x128xf32>
    tpu.vector_store %arg9[%c0_10, %c0_11, %c0_12], %17 {strides = array<i32>} : memref<1x1x128xf32, #tpu.memory_space<vmem>>, vector<1x1x128xf32>,
    %c0_13 = arith.constant 0 : index
    %c0_14 = arith.constant 0 : index
    %18 = vector.load %arg12[%c0_13, %c0_14] : memref<8x1xf32, #tpu.memory_space<vmem>>, vector<8x1xf32>
    %cst_15 = arith.constant dense<0xFF800000> : vector<8xf32>
    %19 = vector.multi_reduction <maximumf>, %12, %cst_15 [1] : vector<8x128xf32> to vector<8xf32>
    %20 = vector.shape_cast %19 : vector<8xf32> to vector<8x1xf32>
    %21 = arith.maximumf %18, %20 : vector<8x1xf32>
    %c0_16 = arith.constant 0 : index
    %c0_17 = arith.constant 0 : index
    %22 = vector.load %arg12[%c0_16, %c0_17] : memref<8x1xf32, #tpu.memory_space<vmem>>, vector<8x1xf32>
    tpu.vector_store %arg12[%c0_16, %c0_17], %21 {strides = array<i32>} : memref<8x1xf32, #tpu.memory_space<vmem>>, vector<8x1xf32>,
    %c0_i32_18 = arith.constant 0 : i32
    %23 = arith.cmpi eq, %arg1, %c0_i32_18 : i32
    %24 = arith.extui %23 : i1 to i32
    %c0_i32_19 = arith.constant 0 : i32
    %25 = arith.cmpi ne, %24, %c0_i32_19 : i32
    scf.if %25 {
      %c0_20 = arith.constant 0 : index
      %c0_21 = arith.constant 0 : index
      %26 = vector.load %arg11[%c0_20, %c0_21] : memref<8x1xf32, #tpu.memory_space<vmem>>, vector<8x1xf32>
      %cst_22 = arith.constant 2.000000e-01 : f32
      %27 = vector.broadcast %cst_22 : f32 to vector<8x1xf32>
      %28 = arith.subf %27, %26 : vector<8x1xf32>
      %c0_23 = arith.constant 0 : index
      %c0_24 = arith.constant 0 : index
      %29 = vector.load %arg12[%c0_23, %c0_24] : memref<8x1xf32, #tpu.memory_space<vmem>>, vector<8x1xf32>
      %30 = arith.addf %28, %29 : vector<8x1xf32>
      %cst_25 = arith.constant 0.000000e+00 : f32
      %31 = vector.broadcast %cst_25 : f32 to vector<8x1xf32>
      %32 = arith.maximumf %30, %31 : vector<8x1xf32>
      %c0_26 = arith.constant 0 : index
      %c0_27 = arith.constant 0 : index
      %33 = vector.load %arg7[%c0_26, %c0_27] : memref<8x1xf32, #tpu.memory_space<vmem>>, vector<8x1xf32>
      tpu.vector_store %arg7[%c0_26, %c0_27], %32 {strides = array<i32>} : memref<8x1xf32, #tpu.memory_space<vmem>>, vector<8x1xf32>,
    } else {
    }
    return
  }
  func.func @transform_0(%arg0: i32, %arg1: i32) -> (i32, i32) {
    %c0_i32 = arith.constant 0 : i32
    %c0_i32_0 = arith.constant 0 : i32
    return %arg0, %c0_i32 : i32, i32
  }
  func.func @transform_1(%arg0: i32, %arg1: i32) -> (i32, i32) {
    %c0_i32 = arith.constant 0 : i32
    %c0_i32_0 = arith.constant 0 : i32
    return %arg0, %c0_i32 : i32, i32
  }
  func.func @transform_2(%arg0: i32, %arg1: i32) -> (i32, i32) {
    %c0_i32 = arith.constant 0 : i32
    %c0_i32_0 = arith.constant 0 : i32
    return %c0_i32, %arg1 : i32, i32
  }
  func.func @transform_3(%arg0: i32, %arg1: i32) -> (i32, i32) {
    %c0_i32 = arith.constant 0 : i32
    %c0_i32_0 = arith.constant 0 : i32
    return %arg0, %c0_i32 : i32, i32
  }
  func.func @transform_4(%arg0: i32, %arg1: i32) -> (i32, i32) {
    %c0_i32 = arith.constant 0 : i32
    %c0_i32_0 = arith.constant 0 : i32
    return %c0_i32, %arg1 : i32, i32
  }
  func.func @transform_5(%arg0: i32, %arg1: i32) -> (i32, i32) {
    %c0_i32 = arith.constant 0 : i32
    %c0_i32_0 = arith.constant 0 : i32
    return %arg0, %c0_i32 : i32, i32
  }
  func.func @transform_6(%arg0: i32, %arg1: i32) -> (i32, i32) {
    %c0_i32 = arith.constant 0 : i32
    %c0_i32_0 = arith.constant 0 : i32
    return %arg0, %c0_i32 : i32, i32
  }
  func.func @transform_7(%arg0: i32, %arg1: i32) -> (i32, i32, i32) {
    %c0_i32 = arith.constant 0 : i32
    %c0_i32_0 = arith.constant 0 : i32
    return %arg0, %c0_i32, %arg1 : i32, i32, i32
  }
}

</mosaic_0001>

<llo_original>
// kernel: tpu_custom_call.1
$region0: #{tpu_custom_call.1}
  #allocation0 [shape = 'u32[]', space=smem, size = 0x4, offset = 0x4, fixed_abs, tag = 'smem constant byte address 0x4 - core index']
  #allocation1 [shape = 'u32[144,128]{1,0:T(1,128)}', space=vmem, size = 0x12000, scoped, tag = 'internal scratch']
  #allocation2 [shape = 'bf16[8,128]{1,0:T(8,128)(2,1)}', space=vmem, size = 0x800, scoped, tag = 'scratch operand']
  #allocation3 [shape = 'f32[8,1]{1,0:T(8,128)}', space=vmem, size = 0x1000, scoped, tag = 'scratch operand']
  #allocation4 [shape = 'f32[8,1]{1,0:T(8,128)}', space=vmem, size = 0x1000, scoped, tag = 'scratch operand']
  %s0 = inlined_call_operand.vmem [shape: f32[8,128], index: 0, kind: input, shape index: {}]
  %s1 = inlined_call_operand.hbm [shape: f32[8,128], index: 1, kind: input, shape index: {}]
  %s2 = inlined_call_operand.hbm [shape: bf16[128,128], index: 2, kind: input, shape index: {}]
  %s3 = inlined_call_operand.vmem [shape: s32[8,1], index: 3, kind: input, shape index: {}]
  %s4 = inlined_call_operand.vmem [shape: s32[1,128], index: 4, kind: input, shape index: {}]
  %s5 = inlined_call_operand.vmem [shape: f32[8,1], index: 5, kind: output, shape index: {0}]
  %s6 = inlined_call_operand.vmem [shape: f32[8,1], index: 6, kind: output, shape index: {1}]
  %s7 = inlined_call_operand.hbm [shape: f32[1,1,128], index: 7, kind: output, shape index: {2}]
  %8 = xla_tuple %s5, %s6, %s7
  %s9 = sld [smem:[#allocation0]]
  $region62: #{tpu_custom_call.1} parent=0
    _
  %s11 = ssub.s32 1, %s9
  %s12 = scalar_select 0, %s11, %s9
  $region1: #{tpu_custom_call.1} parent=0
    #allocation5 [shape = 'u8[4096]{0}', space=vmem, size = 0x1000, scoped, tag = 'input window, operand 1, single buffered']
    #allocation6 [shape = 's32[1]{0}', space=sflag, size = 0x4, scoped, tag = 'scoped memory for tpu_custom_call.1']
    #allocation7 [shape = 's32[1]{0}', space=sflag, size = 0x4, scoped, tag = 'scoped memory for tpu_custom_call.1']
    #allocation8 [shape = 'u8[32768]{0}', space=vmem, size = 0x8000, scoped, tag = 'input window, operand 2, single buffered']
    #allocation9 [shape = 's32[1]{0}', space=sflag, size = 0x4, scoped, tag = 'scoped memory for tpu_custom_call.1']
    #allocation10 [shape = 'u8[512]{0}', space=vmem, size = 0x400, scoped, tag = 'output window, operand 2, single buffered']
    %13 = vsyncpa [#allocation6], 0
    %14 = vsyncpa [#allocation9], 0
    %15 = vsyncpa [#allocation7], 0
    // Predicated region
    $region2: #{tpu_custom_call.1} parent=1 // pred_check
      _
    $region3: #{tpu_custom_call.1} parent=1 // pred_check_branch
      %17 = sbr.rel (0) target = $region5
    $region4: #{tpu_custom_call.1} parent=1 // pred_region
      _
    $region5: #{tpu_custom_call.1} parent=1 // pred_fallthru
      _
    // Predicated region
    $region6: #{tpu_custom_call.1} parent=1 // pred_check
      _
    $region7: #{tpu_custom_call.1} parent=1 // pred_check_branch
      %19 = sbr.rel (0) target = $region9
    $region8: #{tpu_custom_call.1} parent=1 // pred_region
      %s21 = ssub.s32 128, 128
      %22 = vsyncadd [#allocation6], %s21
      %s24 = sshll.u32 [#allocation5], 4
      %s25 = int_to_ptr.vmem [resolvable:$true] %s24
      %27 = dma.hbm_to_vmem [thread:$0]  %s1, 128, %s25, [#allocation6]
    $region9: #{tpu_custom_call.1} parent=1 // pred_fallthru
      _
    // Predicated region
    $region10: #{tpu_custom_call.1} parent=1 // pred_check
      _
    $region11: #{tpu_custom_call.1} parent=1 // pred_check_branch
      %29 = sbr.rel (0) target = $region13
    $region12: #{tpu_custom_call.1} parent=1 // pred_region
      %s31 = ssub.s32 1024, 1024
      %32 = vsyncadd [#allocation9], %s31
      %s33 = sshll.u32 [#allocation8], 4
      %s34 = int_to_ptr.vmem [resolvable:$true] %s33
      %39 = dma.hbm_to_vmem [thread:$0]  %s2, 1024, %s34, [#allocation9], 64, 64, 4
    $region13: #{tpu_custom_call.1} parent=1 // pred_fallthru
      _
    // Predicated region
    $region14: #{tpu_custom_call.1} parent=1 // pred_check
      _
    $region15: #{tpu_custom_call.1} parent=1 // pred_check_branch
      %41 = sbr.rel (0) target = $region17
    $region16: #{tpu_custom_call.1} parent=1 // pred_region
      _
    $region17: #{tpu_custom_call.1} parent=1 // pred_fallthru
      _
    // Predicated region
    $region18: #{tpu_custom_call.1} parent=1 // pred_check
      _
    $region19: #{tpu_custom_call.1} parent=1 // pred_check_branch
      %43 = sbr.rel (0) target = $region21
    $region20: #{tpu_custom_call.1} parent=1 // pred_region
      _
    $region21: #{tpu_custom_call.1} parent=1 // pred_fallthru
      _
    // Predicated region
    $region22: #{tpu_custom_call.1} parent=1 // pred_check
      _
    $region23: #{tpu_custom_call.1} parent=1 // pred_check_branch
      %45 = sbr.rel (0) target = $region25
    $region24: #{tpu_custom_call.1} parent=1 // pred_region
      %46 = dma.done [#allocation6], 128
    $region25: #{tpu_custom_call.1} parent=1 // pred_fallthru
      _
    // Predicated region
    $region26: #{tpu_custom_call.1} parent=1 // pred_check
      _
    $region27: #{tpu_custom_call.1} parent=1 // pred_check_branch
      %48 = sbr.rel (0) target = $region29
    $region28: #{tpu_custom_call.1} parent=1 // pred_region
      %49 = dma.done [#allocation9], 1024
    $region29: #{tpu_custom_call.1} parent=1 // pred_fallthru
      _
    %p51 = scmp.eq.s32.totalorder 0, 0
    // Predicated region
    $region30: #{tpu_custom_call.1} parent=1 // pred_check
      %p52 = pneg %p51
    $region31: #{tpu_custom_call.1} parent=1 // pred_check_branch
      %54 = sbr.rel (%p52) target = $region33
    $region32: #{tpu_custom_call.1} parent=1 // pred_region
      %v55 = vld [vmem:[%s0] sm:$0xff]
      %v56 = vld [vmem:[#allocation5] sm:$0xff]
      %v57 = vmul.f32 %v55, %v55
      %58 = vadd.xlane.f32.xlu0 %v57
      %v59 = vpop.xlane.xlu0 %58
      %v60 = vmax.f32 %v59, 1e-24
      %v61 = vrsqrt.pop %v60
      %v62 = vmul.f32 %v55, %v61
      %v63 = vmul.f32 %v56, %v56
      %64 = vadd.xlane.f32.xlu0 %v63
      %v65 = vpop.xlane.xlu0 %64
      %v66 = vmax.f32 %v65, 1e-24
      %v67 = vrsqrt.pop %v66
      %v68 = vmul.f32 %v56, %v67
      %v69 = vmul.f32 %v62, %v68
      %70 = vadd.xlane.f32.xlu0 %v69
      %v71 = vpop.xlane.xlu0 %70
      %v72 = vpack.c.bf16 %v62, %v62
      %73 = vst [vmem:[#allocation2] sm:$0xf] %v72
      %vm74 = vcmask 7168
      %75 = vst.msk [vmem:[#allocation3] sm:$0xff] %vm74, %v71
      %76 = vst.msk [vmem:[%s6] sm:$0xff] %vm74, %v71
      %77 = vst.msk [vmem:[#allocation4] sm:$0xff] %vm74, -1e+30
    $region33: #{tpu_custom_call.1} parent=1 // pred_fallthru
      _
    %v78 = vld [vmem:[#allocation2] sm:$0xf]
    %v79 = vld [vmem:[#allocation8] sm:$0xf]
    %v80 = vld [vmem:[#allocation8 + $0x4] sm:$0xf]
    %v81 = vld [vmem:[#allocation8 + $0x8] sm:$0xf]
    %v82 = vld [vmem:[#allocation8 + $0xc] sm:$0xf]
    %v83 = vld [vmem:[#allocation8 + $0x10] sm:$0xf]
    %v84 = vld [vmem:[#allocation8 + $0x14] sm:$0xf]
    %v85 = vld [vmem:[#allocation8 + $0x18] sm:$0xf]
    %v86 = vld [vmem:[#allocation8 + $0x1c] sm:$0xf]
    %v87 = vld [vmem:[#allocation8 + $0x20] sm:$0xf]
    %v88 = vld [vmem:[#allocation8 + $0x24] sm:$0xf]
    %v89 = vld [vmem:[#allocation8 + $0x28] sm:$0xf]
    %v90 = vld [vmem:[#allocation8 + $0x2c] sm:$0xf]
    %v91 = vld [vmem:[#allocation8 + $0x30] sm:$0xf]
    %v92 = vld [vmem:[#allocation8 + $0x34] sm:$0xf]
    %v93 = vld [vmem:[#allocation8 + $0x38] sm:$0xf]
    %v94 = vld [vmem:[#allocation8 + $0x3c] sm:$0xf]
    %v111 = vunpack.c.l.b16 %v79
    %v112 = vunpack.c.l.b16 %v80
    %v113 = vunpack.c.l.b16 %v81
    %v114 = vunpack.c.l.b16 %v82
    %v115 = vunpack.c.l.b16 %v83
    %v116 = vunpack.c.l.b16 %v84
    %v117 = vunpack.c.l.b16 %v85
    %v118 = vunpack.c.l.b16 %v86
    %v119 = vunpack.c.l.b16 %v87
    %v120 = vunpack.c.l.b16 %v88
    %v121 = vunpack.c.l.b16 %v89
    %v122 = vunpack.c.l.b16 %v90
    %v123 = vunpack.c.l.b16 %v91
    %v124 = vunpack.c.l.b16 %v92
    %v125 = vunpack.c.l.b16 %v93
    %v126 = vunpack.c.l.b16 %v94
    %v127 = vpack.c.b16 %v112, %v111
    %v128 = vpack.c.b16 %v114, %v113
    %v129 = vpack.c.b16 %v116, %v115
    %v130 = vpack.c.b16 %v118, %v117
    %v131 = vpack.c.b16 %v120, %v119
    %v132 = vpack.c.b16 %v122, %v121
    %v133 = vpack.c.b16 %v124, %v123
    %v134 = vpack.c.b16 %v126, %v125
    %143 = vmatprep.subr.bf16.mxu0 0
    %144 = vmatpush1.bf16.msra.mxu0 %v127
    %145 = vmatprep.subr.bf16.mxu0 0
    %146 = vmatpush1.bf16.msra.mxu0 %v128
    %147 = vmatprep.subr.bf16.mxu0 0
    %148 = vmatpush1.bf16.msra.mxu0 %v129
    %149 = vmatprep.subr.bf16.mxu0 0
    %150 = vmatpush1.bf16.msra.mxu0 %v130
    %151 = vmatprep.subr.bf16.mxu0 0
    %152 = vmatpush1.bf16.msra.mxu0 %v131
    %153 = vmatprep.subr.bf16.mxu0 0
    %154 = vmatpush1.bf16.msra.mxu0 %v132
    %155 = vmatprep.subr.bf16.mxu0 0
    %156 = vmatpush1.bf16.msra.mxu0 %v133
    %157 = vmatprep.subr.bf16.mxu0 0
    %158 = vmatpush1.bf16.msra.mxu0 %v134
    %159 = vmatprep.subr.bf16.mxu0 0
    %160 = vmatpush1.bf16.msra.mxu0 0
    %161 = vmatprep.subr.bf16.mxu0 0
    %162 = vmatpush1.bf16.msra.mxu0 0
    %163 = vmatprep.subr.bf16.mxu0 0
    %164 = vmatpush1.bf16.msra.mxu0 0
    %165 = vmatprep.subr.bf16.mxu0 0
    %166 = vmatpush1.bf16.msra.mxu0 0
    %167 = vmatprep.subr.bf16.mxu0 0
    %168 = vmatpush1.bf16.msra.mxu0 0
    %169 = vmatprep.subr.bf16.mxu0 0
    %170 = vmatpush1.bf16.msra.mxu0 0
    %171 = vmatprep.subr.bf16.mxu0 0
    %172 = vmatpush1.bf16.msra.mxu0 0
    %173 = vmatprep.subr.bf16.mxu0 0
    %174 = vmatpush1.bf16.msra.mxu0 0
    %175 = vmatprep.mubr.bf16.mxu0 0
    %176 = vmatmul.mubr.bf16.gmra.mrb[0].mxu0 %v78
    %v177 = vpop.f32.mrb[0].mxu0
    %v178 = vadd.f32 0.0, %v177
    %v179 = vpop.f32.mrb[0].mxu0
    %v180 = vpop.f32.mrb[0].mxu0
    %v181 = vpop.f32.mrb[0].mxu0
    %182 = vdwg.mxu0
    %v183 = vld [vmem:[%s3] sm:$0xff]
    %v184 = vld [vmem:[%s4] sm:$0x1]
    %185 = vset.pattern.permute.xlu0 0
    %186 = vperm.xlu0 %185, %v183
    %v187 = vpop.permute.xlu0 %186
    %v188 = vlaneseq
    %v189 = vshrl.u32 %v188, 7
    %v190 = vsub.s32 0, %v189
    %v191 = vrot.slane %v184, %v190
    %vm192 = vcmp.eq.s32.totalorder %v187, %v191
    %v193 = vsel %vm192, -1e+30, %v178
    %v194 = vrot.slane %v193, 4
    %v195 = vmax.f32 %v193, %v194
    %v196 = vrot.slane %v195, 2
    %v197 = vmax.f32 %v195, %v196
    %v198 = vrot.slane %v197, 1
    %v199 = vmax.f32 %v197, %v198
    %200 = vst [vmem:[#allocation10] sm:$0x1] %v199
    %v201 = vld [vmem:[#allocation4] sm:$0xff]
    %202 = vmax.xlane.f32.xlu0 %v193
    %v203 = vpop.xlane.xlu0 %202
    %v204 = vmax.f32 %v201, %v203
    %vm205 = vcmask 7168
    %206 = vst.msk [vmem:[#allocation4] sm:$0xff] %vm205, %v204
    // Predicated region
    $region34: #{tpu_custom_call.1} parent=1 // pred_check
      %p207 = pneg %p51
    $region35: #{tpu_custom_call.1} parent=1 // pred_check_branch
      %209 = sbr.rel (%p207) target = $region37
    $region36: #{tpu_custom_call.1} parent=1 // pred_region
      %v210 = vld [vmem:[#allocation3] sm:$0xff]
      %v211 = vsub.f32 0.2, %v210
      %v212 = vld [vmem:[#allocation4] sm:$0xff]
      %v213 = vadd.f32 %v211, %v212
      %v214 = vmax.f32 %v213, 0.0
      %215 = vst.msk [vmem:[%s5] sm:$0xff] %vm205, %v214
    $region37: #{tpu_custom_call.1} parent=1 // pred_fallthru
      _
    // Predicated region
    $region38: #{tpu_custom_call.1} parent=1 // pred_check
      _
    $region39: #{tpu_custom_call.1} parent=1 // pred_check_branch
      %217 = sbr.rel (0) target = $region41
    $region40: #{tpu_custom_call.1} parent=1 // pred_region
      _
    $region41: #{tpu_custom_call.1} parent=1 // pred_fallthru
      _
    // Predicated region
    $region42: #{tpu_custom_call.1} parent=1 // pred_check
      _
    $region43: #{tpu_custom_call.1} parent=1 // pred_check_branch
      %219 = sbr.rel (0) target = $region45
    $region44: #{tpu_custom_call.1} parent=1 // pred_region
      _
    $region45: #{tpu_custom_call.1} parent=1 // pred_fallthru
      _
    // Predicated region
    $region46: #{tpu_custom_call.1} parent=1 // pred_check
      _
    $region47: #{tpu_custom_call.1} parent=1 // pred_check_branch
      %221 = sbr.rel (0) target = $region49
    $region48: #{tpu_custom_call.1} parent=1 // pred_region
      %s223 = ssub.s32 16, 16
      %224 = vsyncadd [#allocation7], %s223
      %s226 = sshll.u32 [#allocation10], 4
      %s227 = int_to_ptr.vmem [resolvable:$true] %s226
      %229 = dma.vmem_to_hbm [thread:$0]  %s227, 16, %s7, [#allocation7]
    $region49: #{tpu_custom_call.1} parent=1 // pred_fallthru
      _
    // Predicated region
    $region50: #{tpu_custom_call.1} parent=1 // pred_check
      _
    $region51: #{tpu_custom_call.1} parent=1 // pred_check_branch
      %231 = sbr.rel (0) target = $region53
    $region52: #{tpu_custom_call.1} parent=1 // pred_region
      _
    $region53: #{tpu_custom_call.1} parent=1 // pred_fallthru
      _
    // Predicated region
    $region54: #{tpu_custom_call.1} parent=1 // pred_check
      _
    $region55: #{tpu_custom_call.1} parent=1 // pred_check_branch
      %233 = sbr.rel (0) target = $region57
    $region56: #{tpu_custom_call.1} parent=1 // pred_region
      _
    $region57: #{tpu_custom_call.1} parent=1 // pred_fallthru
      _
    // Predicated region
    $region58: #{tpu_custom_call.1} parent=1 // pred_check
      _
    $region59: #{tpu_custom_call.1} parent=1 // pred_check_branch
      %235 = sbr.rel (0) target = $region61
    $region60: #{tpu_custom_call.1} parent=1 // pred_region
      %236 = dma.done [#allocation7], 16
    $region61: #{tpu_custom_call.1} parent=1 // pred_fallthru
      _
    %237 = vsyncpa [#allocation6], 1
    %238 = vsyncpa [#allocation9], 1
    %239 = vsyncpa [#allocation7], 1

</llo_original>
